<compile_context>
chip_gen: v5e
topology: v5e:2x2
jax: 0.10.0
libtpu: 0.0.40
codegen_flags: <defaults>
</compile_context>

<pallas_src>
import numpy as np
import jax
import jax.numpy as jnp
from jax.experimental import pallas as pl
from jax.experimental.pallas import tpu as pltpu


# ---------------------------------------------------------------------------
# Fused head: Conv2d(CIN->C1, k3, s1, p1) -> Conv2d(C1->C2, k3, s2, p1)
# ---------------------------------------------------------------------------
def _fused_forward_impl(x, w1, b1, w2, b2):
    """x: (B, H, W, CIN) f32 NHWC; w*: (3,3,Cin,Cout) f32; b*: (Cout,) f32."""
    B, H, W, CIN = x.shape
    C1 = w1.shape[-1]
    C2 = w2.shape[-1]
    assert H % 2 == 0 and W % 2 == 0
    HO, WO = H // 2, W // 2
    M = B * HO * WO            # lane axis: every stride-2 output position (=128 here)
    K1 = 9 * CIN               # layer-1 contraction depth (3x3 taps x Cin) = 36
    K2 = 9 * C1                # layer-2 contraction depth                  = 72
    N1 = 9 * M                 # layer-1 columns: one per (layer-2 tap, position)

    # ---- wrapper-side packing: pure layout, fuses into one tiny XLA fusion ----
    # xcol[(kh2*3+kw2)*CIN + c, (kh*3+kw)*M + m],  m = b*HO*WO + i*WO + j
    #   = x_pad1[b, (2i+kh-1)+kh2, (2j+kw-1)+kw2, c]
    # (the layer-1 im2col patch of the h1 position layer-2 tap (kh,kw) reads at
    #  output (b,i,j)).  pad(x, 2) keeps the masked-out row/col -1 reads legal.
    xb = x.astype(jnp.bfloat16)                         # cast activations once
    xp2 = jnp.pad(xb, ((0, 0), (2, 2), (2, 2), (0, 0)))
    blocks = []
    for kh in range(3):
        for kw in range(3):
            sub = []
            for kh2 in range(3):
                for kw2 in range(3):
                    sub.append(xp2[:, kh + kh2: kh + kh2 + 2 * HO: 2,
                                      kw + kw2: kw + kw2 + 2 * WO: 2, :])
            blk = jnp.stack(sub, axis=0)                # (9, B, HO, WO, CIN)
            blk = jnp.transpose(blk, (0, 4, 1, 2, 3))   # (9, CIN, B, HO, WO)
            blocks.append(blk.reshape(K1, M))
    xcol = jnp.concatenate(blocks, axis=1)              # (K1, N1) bf16

    # 0/1 row: positions where the stride-2 conv reads its own zero padding
    # (h1 row/col index -1) must yield 0, not the layer-1 bias.
    valid = np.ones((3, 3, B, HO, WO), np.float32)
    valid[0, :, :, 0, :] = 0.0          # kh == 0 reads h1 row 2i-1 -> -1 at i == 0
    valid[:, 0, :, :, 0] = 0.0          # kw == 0 reads h1 col 2j-1 -> -1 at j == 0
    valid = jnp.asarray(valid.reshape(1, N1))

    # channel-major weights (Cout, 9*Cin); column order (kh, kw, cin) matches xcol/p2
    w1cm = jnp.transpose(w1, (3, 0, 1, 2)).reshape(C1, K1).astype(jnp.bfloat16)
    w2cm = jnp.transpose(w2, (3, 0, 1, 2)).reshape(C2, K2).astype(jnp.bfloat16)
    b1c = b1.reshape(C1, 1).astype(jnp.float32)
    b2c = b2.reshape(C2, 1).astype(jnp.float32)

    # ---- the fused kernel: 2 contractions, no scratch, no in-kernel relayouts ----
    def kernel(xcol_ref, valid_ref, w1_ref, b1_ref, w2_ref, b2_ref, out_ref):
        # layer 1: ONE contraction (C1, K1) @ (K1, N1), f32 accumulation on the MXU
        h1 = jnp.dot(w1_ref[...], xcol_ref[...],
                     preferred_element_type=jnp.float32)           # (C1, N1) f32
        h1 = (h1 + b1_ref[...]) * valid_ref[...]                   # bias + s2 padding
        # layer-2 im2col: its 9 taps are exactly the 9 lane-aligned (C1, M)
        # column blocks of h1 -> stack along sublanes (aligned full-tile slices).
        p2 = jnp.concatenate([h1[:, t * M:(t + 1) * M] for t in range(9)],
                             axis=0).astype(jnp.bfloat16)          # (K2, M) bf16
        # layer 2: ONE contraction (C2, K2) @ (K2, M)
        out = jnp.dot(w2_ref[...], p2, preferred_element_type=jnp.float32)
        out_ref[...] = out + b2_ref[...]                           # (C2, M) lane-dense

    flops = 2 * (C1 * K1 * N1 + C2 * K2 * M)
    bytes_accessed = int(xcol.size * 2 + valid.size * 4 + w1cm.size * 2
                         + w2cm.size * 2 + (C1 + C2) * 4 + C2 * M * 4)

    out = pl.pallas_call(
        kernel,
        out_shape=jax.ShapeDtypeStruct((C2, M), jnp.float32),
        grid=(1,),                                    # single step: batch fused into lanes
        in_specs=[
            pl.BlockSpec((K1, N1), lambda i: (0, 0)),
            pl.BlockSpec((1, N1), lambda i: (0, 0)),
            pl.BlockSpec((C1, K1), lambda i: (0, 0)),
            pl.BlockSpec((C1, 1), lambda i: (0, 0)),
            pl.BlockSpec((C2, K2), lambda i: (0, 0)),
            pl.BlockSpec((C2, 1), lambda i: (0, 0)),
        ],
        out_specs=pl.BlockSpec((C2, M), lambda i: (0, 0)),
        compiler_params=pltpu.CompilerParams(
            dimension_semantics=("arbitrary",),
            vmem_limit_bytes=32 * 1024 * 1024,        # actual use is ~0.3 MiB
        ),
        cost_estimate=pl.CostEstimate(flops=flops, transcendentals=0,
                                      bytes_accessed=bytes_accessed),
    )(xcol, valid, w1cm, b1c, w2cm, b2c)

    # (C2, B*HO*WO) -> (B, HO, WO, C2): layout plumbing, not compute.
    return jnp.transpose(out.reshape(C2, B, HO, WO), (1, 2, 3, 0))


_fused_forward = jax.jit(_fused_forward_impl)


# ---------------------------------------------------------------------------
# ResConvHead (JAX/Pallas version of the PyTorch module)
# ---------------------------------------------------------------------------
class Config:
    def __init__(self):
        self.n_residual_block = 0
        self.n_filter_list = [4, 8, 16]
        self.n_upsample_list = [0, 0]      # conv-only path (no ResBlock)
        self.n_downsample_list = [0, 1]    # second conv downsamples (stride 2)


class ResConvHead:
    """Fused-kernel port of ResConvHead for its conv-only configuration."""

    def __init__(self, config, key):
        self.config = config
        fl = config.n_filter_list
        # TODO(synk): the ResBlock branch (n_upsample_list[i] != 0) is not
        #             implemented -- the ResBlock definition is not part of the
        #             source file; this config exercises only the Conv2d path.
        assert all(u == 0 for u in config.n_upsample_list)
        assert len(fl) == 3 and list(config.n_downsample_list) == [0, 1]
        self.layers = []  # (w_hwio, bias, stride), PyTorch-style uniform init
        for i in range(len(fl) - 1):
            cin, cout = fl[i], fl[i + 1]
            stride = 2 if config.n_downsample_list[i] else 1
            key, kw_, kb_ = jax.random.split(key, 3)
            bound = 1.0 / np.sqrt(cin * 9)
            w = jax.random.uniform(kw_, (3, 3, cin, cout), jnp.float32,
                                   minval=-bound, maxval=bound)
            b = jax.random.uniform(kb_, (cout,), jnp.float32,
                                   minval=-bound, maxval=bound)
            self.layers.append((w, b, stride))

    def __call__(self, target_2d_feature):
        # PyTorch permutes NHWC -> NCHW and back; on TPU we stay NHWC.
        (w1, b1, _), (w2, b2, _) = self.layers
        return _fused_forward(target_2d_feature, w1, b1, w2, b2)


# ---------------------------------------------------------------------------
# Plain-JAX reference (lax conv) to validate the fused Pallas kernel.
# ---------------------------------------------------------------------------
def _reference_forward(x, layers, operand_dtype=jnp.float32):
    """operand_dtype=bf16 reproduces the kernel's MXU operand rounding."""
    y = x
    for w, b, stride in layers:
        lhs = y.astype(operand_dtype).astype(jnp.float32)
        rhs = w.astype(operand_dtype).astype(jnp.float32)
        y = jax.lax.conv_general_dilated(
            lhs, rhs, window_strides=(stride, stride),
            padding=((1, 1), (1, 1)),
            dimension_numbers=("NHWC", "HWIO", "NHWC"))
        y = y + b.reshape(1, 1, 1, -1).astype(jnp.float32)
    return y


if __name__ == "__main__":
    key = jax.random.PRNGKey(0)
    k_param, k_x = jax.random.split(key)

    cfg = Config()
    head = ResConvHead(cfg, k_param)

    # [B, H, W, C] = [2, 16, 16, 4]
    x = jax.random.normal(k_x, (2, 16, 16, 4), jnp.float32)

    out = jax.block_until_ready(head(x))
    assert out.shape == (2, 8, 8, 16), out.shape

    # Tight check vs a reference that uses the same bf16-rounded MXU operands
    # (differences are only f32 accumulation order).
    ref_bf16 = jax.block_until_ready(
        _reference_forward(x, head.layers, jnp.bfloat16))
    np.testing.assert_allclose(np.asarray(out), np.asarray(ref_bf16),
                               atol=2e-3, rtol=2e-3)

    # Looser end-to-end sanity check vs the pure-f32 reference (bf16 operand
    # rounding contributes ~0.5% relative error).
    ref_f32 = jax.block_until_ready(
        _reference_forward(x, head.layers, jnp.float32))
    np.testing.assert_allclose(np.asarray(out), np.asarray(ref_f32),
                               atol=3e-2, rtol=3e-2)

    print("KERNEL_OK")
</pallas_src>

<mosaic_0001>
module attributes {stable_mosaic.version = 11 : i64} {
  func.func @kernel(%arg0: i32, %arg1: memref<36x1152xbf16, #tpu.memory_space<vmem>>, %arg2: memref<1x1152xf32, #tpu.memory_space<vmem>>, %arg3: memref<8x36xbf16, #tpu.memory_space<vmem>>, %arg4: memref<8x1xf32, #tpu.memory_space<vmem>>, %arg5: memref<16x72xbf16, #tpu.memory_space<vmem>>, %arg6: memref<16x1xf32, #tpu.memory_space<vmem>>, %arg7: memref<16x128xf32, #tpu.memory_space<vmem>>) attributes {dimension_semantics = [#tpu.dimension_semantics<arbitrary>], iteration_bounds = array<i64: 1>, scalar_prefetch = 0 : i64, scratch_operands = 0 : i64, tpu.core_type = #tpu.core_type<tc>, window_params = [{pipeline_mode = #tpu.pipeline_mode<synchronous>, transform_indices = @transform_0, window_bounds = array<i64: 36, 1152>}, {pipeline_mode = #tpu.pipeline_mode<synchronous>, transform_indices = @transform_1, window_bounds = array<i64: 1, 1152>}, {pipeline_mode = #tpu.pipeline_mode<synchronous>, transform_indices = @transform_2, window_bounds = array<i64: 8, 36>}, {pipeline_mode = #tpu.pipeline_mode<synchronous>, transform_indices = @transform_3, window_bounds = array<i64: 8, 1>}, {pipeline_mode = #tpu.pipeline_mode<synchronous>, transform_indices = @transform_4, window_bounds = array<i64: 16, 72>}, {pipeline_mode = #tpu.pipeline_mode<synchronous>, transform_indices = @transform_5, window_bounds = array<i64: 16, 1>}, {pipeline_mode = #tpu.pipeline_mode<synchronous>, transform_indices = @transform_6, window_bounds = array<i64: 16, 128>}]} {
    %c0 = arith.constant 0 : index
    %c0_0 = arith.constant 0 : index
    %0 = vector.load %arg3[%c0, %c0_0] : memref<8x36xbf16, #tpu.memory_space<vmem>>, vector<8x36xbf16>
    %c0_1 = arith.constant 0 : index
    %c0_2 = arith.constant 0 : index
    %1 = vector.load %arg1[%c0_1, %c0_2] : memref<36x1152xbf16, #tpu.memory_space<vmem>>, vector<36x1152xbf16>
    %cst = arith.constant dense<0.000000e+00> : vector<8x1152xf32>
    %2 = tpu.matmul %0, %1, %cst {dimension_numbers = #tpu.dot_dimension_numbers<[1], [0], [0], [1], [0, 0, 1, 1], [], []>} : vector<8x36xbf16>, vector<36x1152xbf16>, vector<8x1152xf32> -> vector<8x1152xf32>
    %c0_3 = arith.constant 0 : index
    %c0_4 = arith.constant 0 : index
    %3 = vector.load %arg4[%c0_3, %c0_4] : memref<8x1xf32, #tpu.memory_space<vmem>>, vector<8x1xf32>
    %4 = vector.broadcast %3 : vector<8x1xf32> to vector<8x1152xf32>
    %5 = arith.addf %2, %4 : vector<8x1152xf32>
    %c0_5 = arith.constant 0 : index
    %c0_6 = arith.constant 0 : index
    %6 = vector.load %arg2[%c0_5, %c0_6] : memref<1x1152xf32, #tpu.memory_space<vmem>>, vector<1x1152xf32>
    %7 = vector.broadcast %6 : vector<1x1152xf32> to vector<8x1152xf32>
    %8 = arith.mulf %5, %7 : vector<8x1152xf32>
    %9 = vector.extract_strided_slice %8 {offsets = [0, 0], sizes = [8, 128], strides = [1, 1]} : vector<8x1152xf32> to vector<8x128xf32>
    %10 = vector.extract_strided_slice %8 {offsets = [0, 128], sizes = [8, 128], strides = [1, 1]} : vector<8x1152xf32> to vector<8x128xf32>
    %11 = vector.extract_strided_slice %8 {offsets = [0, 256], sizes = [8, 128], strides = [1, 1]} : vector<8x1152xf32> to vector<8x128xf32>
    %12 = vector.extract_strided_slice %8 {offsets = [0, 384], sizes = [8, 128], strides = [1, 1]} : vector<8x1152xf32> to vector<8x128xf32>
    %13 = vector.extract_strided_slice %8 {offsets = [0, 512], sizes = [8, 128], strides = [1, 1]} : vector<8x1152xf32> to vector<8x128xf32>
    %14 = vector.extract_strided_slice %8 {offsets = [0, 640], sizes = [8, 128], strides = [1, 1]} : vector<8x1152xf32> to vector<8x128xf32>
    %15 = vector.extract_strided_slice %8 {offsets = [0, 768], sizes = [8, 128], strides = [1, 1]} : vector<8x1152xf32> to vector<8x128xf32>
    %16 = vector.extract_strided_slice %8 {offsets = [0, 896], sizes = [8, 128], strides = [1, 1]} : vector<8x1152xf32> to vector<8x128xf32>
    %17 = vector.extract_strided_slice %8 {offsets = [0, 1024], sizes = [8, 128], strides = [1, 1]} : vector<8x1152xf32> to vector<8x128xf32>
    %18 = tpu.concatenate %9, %10, %11, %12, %13, %14, %15, %16, %17 in 0 : vector<8x128xf32>, vector<8x128xf32>, vector<8x128xf32>, vector<8x128xf32>, vector<8x128xf32>, vector<8x128xf32>, vector<8x128xf32>, vector<8x128xf32>, vector<8x128xf32> -> vector<72x128xf32>
    %19 = arith.truncf %18 : vector<72x128xf32> to vector<72x128xbf16>
    %c0_7 = arith.constant 0 : index
    %c0_8 = arith.constant 0 : index
    %20 = vector.load %arg5[%c0_7, %c0_8] : memref<16x72xbf16, #tpu.memory_space<vmem>>, vector<16x72xbf16>
    %cst_9 = arith.constant dense<0.000000e+00> : vector<16x128xf32>
    %21 = tpu.matmul %20, %19, %cst_9 {dimension_numbers = #tpu.dot_dimension_numbers<[1], [0], [0], [1], [0, 0, 1, 1], [], []>} : vector<16x72xbf16>, vector<72x128xbf16>, vector<16x128xf32> -> vector<16x128xf32>
    %c0_10 = arith.constant 0 : index
    %c0_11 = arith.constant 0 : index
    %22 = vector.load %arg6[%c0_10, %c0_11] : memref<16x1xf32, #tpu.memory_space<vmem>>, vector<16x1xf32>
    %23 = vector.broadcast %22 : vector<16x1xf32> to vector<16x128xf32>
    %24 = arith.addf %21, %23 : vector<16x128xf32>
    %c0_12 = arith.constant 0 : index
    %c0_13 = arith.constant 0 : index
    %25 = vector.load %arg7[%c0_12, %c0_13] : memref<16x128xf32, #tpu.memory_space<vmem>>, vector<16x128xf32>
    tpu.vector_store %arg7[%c0_12, %c0_13], %24 {strides = array<i32>} : memref<16x128xf32, #tpu.memory_space<vmem>>, vector<16x128xf32>,
    return
  }
  func.func @transform_0(%arg0: i32) -> (i32, i32) {
    %c0_i32 = arith.constant 0 : i32
    %c0_i32_0 = arith.constant 0 : i32
    %c0_i32_1 = arith.constant 0 : i32
    return %c0_i32, %c0_i32_0 : i32, i32
  }
  func.func @transform_1(%arg0: i32) -> (i32, i32) {
    %c0_i32 = arith.constant 0 : i32
    %c0_i32_0 = arith.constant 0 : i32
    %c0_i32_1 = arith.constant 0 : i32
    return %c0_i32, %c0_i32_0 : i32, i32
  }
  func.func @transform_2(%arg0: i32) -> (i32, i32) {
    %c0_i32 = arith.constant 0 : i32
    %c0_i32_0 = arith.constant 0 : i32
    %c0_i32_1 = arith.constant 0 : i32
    return %c0_i32, %c0_i32_0 : i32, i32
  }
  func.func @transform_3(%arg0: i32) -> (i32, i32) {
    %c0_i32 = arith.constant 0 : i32
    %c0_i32_0 = arith.constant 0 : i32
    %c0_i32_1 = arith.constant 0 : i32
    return %c0_i32, %c0_i32_0 : i32, i32
  }
  func.func @transform_4(%arg0: i32) -> (i32, i32) {
    %c0_i32 = arith.constant 0 : i32
    %c0_i32_0 = arith.constant 0 : i32
    %c0_i32_1 = arith.constant 0 : i32
    return %c0_i32, %c0_i32_0 : i32, i32
  }
  func.func @transform_5(%arg0: i32) -> (i32, i32) {
    %c0_i32 = arith.constant 0 : i32
    %c0_i32_0 = arith.constant 0 : i32
    %c0_i32_1 = arith.constant 0 : i32
    return %c0_i32, %c0_i32_0 : i32, i32
  }
  func.func @transform_6(%arg0: i32) -> (i32, i32) {
    %c0_i32 = arith.constant 0 : i32
    %c0_i32_0 = arith.constant 0 : i32
    %c0_i32_1 = arith.constant 0 : i32
    return %c0_i32, %c0_i32_0 : i32, i32
  }
}

</mosaic_0001>

<llo_original>
// kernel: _fused_forward_impl.1
$region0: #{_fused_forward_impl.1}
  #allocation0 [shape = 'u32[]', space=smem, size = 0x4, offset = 0x4, fixed_abs, tag = 'smem constant byte address 0x4 - core index']
  #allocation1 [shape = 'u32[72,128]{1,0:T(1,128)}', space=vmem, size = 0x9000, scoped, tag = 'internal scratch']
  %s0 = inlined_call_operand.vmem [shape: bf16[36,1152], index: 0, kind: input, shape index: {}]
  %s1 = inlined_call_operand.vmem [shape: f32[1,1152], index: 1, kind: input, shape index: {}]
  %s2 = inlined_call_operand.vmem [shape: bf16[8,36], index: 2, kind: input, shape index: {}]
  %s3 = inlined_call_operand.vmem [shape: f32[8,1], index: 3, kind: input, shape index: {}]
  %s4 = inlined_call_operand.vmem [shape: bf16[16,72], index: 4, kind: input, shape index: {}]
  %s5 = inlined_call_operand.vmem [shape: f32[16,1], index: 5, kind: input, shape index: {}]
  %s6 = inlined_call_operand.vmem [shape: f32[16,128], index: 6, kind: output, shape index: {}]
  %s7 = sld [smem:[#allocation0]]
  $region34: #{_fused_forward_impl.1} parent=0
    _
  %s9 = ssub.s32 1, %s7
  %s10 = scalar_select 0, %s9, %s7
  // Predicated region
  $region2: #{_fused_forward_impl.1} parent=0 // pred_check
    _
  $region3: #{_fused_forward_impl.1} parent=0 // pred_check_branch
    %12 = sbr.rel (0) target = $region5
  $region4: #{_fused_forward_impl.1} parent=0 // pred_region
    _
  $region5: #{_fused_forward_impl.1} parent=0 // pred_fallthru
    _
  // Predicated region
  $region6: #{_fused_forward_impl.1} parent=0 // pred_check
    _
  $region7: #{_fused_forward_impl.1} parent=0 // pred_check_branch
    %14 = sbr.rel (0) target = $region9
  $region8: #{_fused_forward_impl.1} parent=0 // pred_region
    _
  $region9: #{_fused_forward_impl.1} parent=0 // pred_fallthru
    _
  // Predicated region
  $region10: #{_fused_forward_impl.1} parent=0 // pred_check
    _
  $region11: #{_fused_forward_impl.1} parent=0 // pred_check_branch
    %16 = sbr.rel (0) target = $region13
  $region12: #{_fused_forward_impl.1} parent=0 // pred_region
    _
  $region13: #{_fused_forward_impl.1} parent=0 // pred_fallthru
    _
  // Predicated region
  $region14: #{_fused_forward_impl.1} parent=0 // pred_check
    _
  $region15: #{_fused_forward_impl.1} parent=0 // pred_check_branch
    %18 = sbr.rel (0) target = $region17
  $region16: #{_fused_forward_impl.1} parent=0 // pred_region
    _
  $region17: #{_fused_forward_impl.1} parent=0 // pred_fallthru
    _
  // Predicated region
  $region18: #{_fused_forward_impl.1} parent=0 // pred_check
    _
  $region19: #{_fused_forward_impl.1} parent=0 // pred_check_branch
    %20 = sbr.rel (0) target = $region21
  $region20: #{_fused_forward_impl.1} parent=0 // pred_region
    _
  $region21: #{_fused_forward_impl.1} parent=0 // pred_fallthru
    _
  // Predicated region
  $region22: #{_fused_forward_impl.1} parent=0 // pred_check
    _
  $region23: #{_fused_forward_impl.1} parent=0 // pred_check_branch
    %22 = sbr.rel (0) target = $region25
  $region24: #{_fused_forward_impl.1} parent=0 // pred_region
    _
  $region25: #{_fused_forward_impl.1} parent=0 // pred_fallthru
    _
  %v24 = vld [vmem:[%s2] sm:$0xf]
  %v25 = vld [vmem:[%s0] sm:$0xff]
  %v26 = vld [vmem:[%s0 + $0x8] sm:$0xff]
  %v27 = vld [vmem:[%s0 + $0x10] sm:$0xff]
  %v28 = vld [vmem:[%s0 + $0x18] sm:$0xff]
  %v29 = vld [vmem:[%s0 + $0x20] sm:$0xf]
  %v30 = vld [vmem:[%s0 + $0x24] sm:$0xff]
  %v31 = vld [vmem:[%s0 + $0x2c] sm:$0xff]
  %v32 = vld [vmem:[%s0 + $0x34] sm:$0xff]
  %v33 = vld [vmem:[%s0 + $0x3c] sm:$0xff]
  %v34 = vld [vmem:[%s0 + $0x44] sm:$0xf]
  %v35 = vld [vmem:[%s0 + $0x48] sm:$0xff]
  %v36 = vld [vmem:[%s0 + $0x50] sm:$0xff]
  %v37 = vld [vmem:[%s0 + $0x58] sm:$0xff]
  %v38 = vld [vmem:[%s0 + $0x60] sm:$0xff]
  %v39 = vld [vmem:[%s0 + $0x68] sm:$0xf]
  %v40 = vld [vmem:[%s0 + $0x6c] sm:$0xff]
  %v41 = vld [vmem:[%s0 + $0x74] sm:$0xff]
  %v42 = vld [vmem:[%s0 + $0x7c] sm:$0xff]
  %v43 = vld [vmem:[%s0 + $0x84] sm:$0xff]
  %v44 = vld [vmem:[%s0 + $0x8c] sm:$0xf]
  %v45 = vld [vmem:[%s0 + $0x90] sm:$0x33]
  %v46 = vld [vmem:[%s0 + $0x98] sm:$0x33]
  %v47 = vld [vmem:[%s0 + $0xa0] sm:$0x33]
  %v48 = vld [vmem:[%s0 + $0xa8] sm:$0x33]
  %v49 = vld [vmem:[%s0 + $0xb0] sm:$0x3]
  %v50 = vld [vmem:[%s3] sm:$0xff]
  %52 = vset.pattern.permute.xlu0 0
  %53 = vperm.xlu0 %52, %v50
  %v54 = vpop.permute.xlu0 %53
  %v81 = vunpack.c.l.b16 %v25
  %v82 = vunpack.c.h.b16 %v25
  %v83 = vunpack.c.l.b16 %v26
  %v84 = vunpack.c.h.b16 %v26
  %v85 = vunpack.c.l.b16 %v27
  %v86 = vunpack.c.h.b16 %v27
  %v87 = vunpack.c.l.b16 %v28
  %v88 = vunpack.c.h.b16 %v28
  %v89 = vunpack.c.l.b16 %v29
  %v90 = vunpack.c.l.b16 %v30
  %v91 = vunpack.c.h.b16 %v30
  %v92 = vunpack.c.l.b16 %v31
  %v93 = vunpack.c.h.b16 %v31
  %v94 = vunpack.c.l.b16 %v32
  %v95 = vunpack.c.h.b16 %v32
  %v96 = vunpack.c.l.b16 %v33
  %v97 = vunpack.c.h.b16 %v33
  %v98 = vunpack.c.l.b16 %v34
  %v99 = vunpack.c.l.b16 %v35
  %v100 = vunpack.c.h.b16 %v35
  %v101 = vunpack.c.l.b16 %v36
  %v102 = vunpack.c.h.b16 %v36
  %v103 = vunpack.c.l.b16 %v37
  %v104 = vunpack.c.h.b16 %v37
  %v105 = vunpack.c.l.b16 %v38
  %v106 = vunpack.c.h.b16 %v38
  %v107 = vunpack.c.l.b16 %v39
  %v108 = vunpack.c.l.b16 %v40
  %v109 = vunpack.c.h.b16 %v40
  %v110 = vunpack.c.l.b16 %v41
  %v111 = vunpack.c.h.b16 %v41
  %v112 = vunpack.c.l.b16 %v42
  %v113 = vunpack.c.h.b16 %v42
  %v114 = vunpack.c.l.b16 %v43
  %v115 = vunpack.c.h.b16 %v43
  %v116 = vunpack.c.l.b16 %v44
  %v117 = vunpack.c.l.b16 %v45
  %v118 = vunpack.c.h.b16 %v45
  %v119 = vunpack.c.l.b16 %v46
  %v120 = vunpack.c.h.b16 %v46
  %v121 = vunpack.c.l.b16 %v47
  %v122 = vunpack.c.h.b16 %v47
  %v123 = vunpack.c.l.b16 %v48
  %v124 = vunpack.c.h.b16 %v48
  %v125 = vunpack.c.l.b16 %v49
  %v126 = vpack.c.b16 %v90, %v81
  %v127 = vpack.c.b16 %v91, %v82
  %v128 = vpack.c.b16 %v92, %v83
  %v129 = vpack.c.b16 %v93, %v84
  %v130 = vpack.c.b16 %v94, %v85
  %v131 = vpack.c.b16 %v95, %v86
  %v132 = vpack.c.b16 %v96, %v87
  %v133 = vpack.c.b16 %v97, %v88
  %v134 = vpack.c.b16 %v98, %v89
  %v135 = vpack.c.b16 %v108, %v99
  %v136 = vpack.c.b16 %v109, %v100
  %v137 = vpack.c.b16 %v110, %v101
  %v138 = vpack.c.b16 %v111, %v102
  %v139 = vpack.c.b16 %v112, %v103
  %v140 = vpack.c.b16 %v113, %v104
  %v141 = vpack.c.b16 %v114, %v105
  %v142 = vpack.c.b16 %v115, %v106
  %v143 = vpack.c.b16 %v116, %v107
  %v144 = vpack.c.b16 %v117, %v117
  %v145 = vpack.c.b16 %v118, %v118
  %v146 = vpack.c.b16 %v119, %v119
  %v147 = vpack.c.b16 %v120, %v120
  %v148 = vpack.c.b16 %v121, %v121
  %v149 = vpack.c.b16 %v122, %v122
  %v150 = vpack.c.b16 %v123, %v123
  %v151 = vpack.c.b16 %v124, %v124
  %v152 = vpack.c.b16 %v125, %v125
  %vm171 = vcmask 293888
  %v173 = vsel %vm171, %v24, 0
  %vm175 = vcmask 1041408
  %v177 = vsel %vm175, %v144, 0
  %v180 = vsel %vm175, %v145, 0
  %v183 = vsel %vm175, %v146, 0
  %v186 = vsel %vm175, %v147, 0
  %v189 = vsel %vm175, %v148, 0
  %v192 = vsel %vm175, %v149, 0
  %v195 = vsel %vm175, %v150, 0
  %v198 = vsel %vm175, %v151, 0
  %v201 = vsel %vm175, %v152, 0
  %203 = vmatpush.bf16.msra.mxu0 0
  %204 = vmatpush.bf16.msra.mxu0 0
  %205 = vmatpush.bf16.msra.mxu0 0
  %206 = vmatpush.bf16.msra.mxu0 0
  %207 = vmatpush.bf16.msra.mxu0 0
  %208 = vmatpush.bf16.msra.mxu0 %v177
  %209 = vmatpush.bf16.msra.mxu0 %v135
  %210 = vmatpush.bf16.msra.mxu0 %v126
  %211 = vmatmul.bf16.gmra.mxu0 %v173
  %v212 = vpop.f32.mrf.mxu0
  %v213 = vadd.f32 %v54, %v212
  %v214 = vpop.f32.mrf.mxu0
  %215 = vdwg.mxu0
  %216 = vmatpush.bf16.msra.mxu0 0
  %217 = vmatpush.bf16.msra.mxu0 0
  %218 = vmatpush.bf16.msra.mxu0 0
  %219 = vmatpush.bf16.msra.mxu0 0
  %220 = vmatpush.bf16.msra.mxu0 0
  %221 = vmatpush.bf16.msra.mxu0 %v180
  %222 = vmatpush.bf16.msra.mxu0 %v136
  %223 = vmatpush.bf16.msra.mxu0 %v127
  %224 = vmatmul.bf16.gmra.mxu0 %v173
  %v225 = vpop.f32.mrf.mxu0
  %v226 = vadd.f32 %v54, %v225
  %v227 = vpop.f32.mrf.mxu0
  %228 = vdwg.mxu0
  %229 = vmatpush.bf16.msra.mxu0 0
  %230 = vmatpush.bf16.msra.mxu0 0
  %231 = vmatpush.bf16.msra.mxu0 0
  %232 = vmatpush.bf16.msra.mxu0 0
  %233 = vmatpush.bf16.msra.mxu0 0
  %234 = vmatpush.bf16.msra.mxu0 %v183
  %235 = vmatpush.bf16.msra.mxu0 %v137
  %236 = vmatpush.bf16.msra.mxu0 %v128
  %237 = vmatmul.bf16.gmra.mxu0 %v173
  %v238 = vpop.f32.mrf.mxu0
  %v239 = vadd.f32 %v54, %v238
  %v240 = vpop.f32.mrf.mxu0
  %241 = vdwg.mxu0
  %242 = vmatpush.bf16.msra.mxu0 0
  %243 = vmatpush.bf16.msra.mxu0 0
  %244 = vmatpush.bf16.msra.mxu0 0
  %245 = vmatpush.bf16.msra.mxu0 0
  %246 = vmatpush.bf16.msra.mxu0 0
  %247 = vmatpush.bf16.msra.mxu0 %v186
  %248 = vmatpush.bf16.msra.mxu0 %v138
  %249 = vmatpush.bf16.msra.mxu0 %v129
  %250 = vmatmul.bf16.gmra.mxu0 %v173
  %v251 = vpop.f32.mrf.mxu0
  %v252 = vadd.f32 %v54, %v251
  %v253 = vpop.f32.mrf.mxu0
  %254 = vdwg.mxu0
  %255 = vmatpush.bf16.msra.mxu0 0
  %256 = vmatpush.bf16.msra.mxu0 0
  %257 = vmatpush.bf16.msra.mxu0 0
  %258 = vmatpush.bf16.msra.mxu0 0
  %259 = vmatpush.bf16.msra.mxu0 0
  %260 = vmatpush.bf16.msra.mxu0 %v189
  %261 = vmatpush.bf16.msra.mxu0 %v139
  %262 = vmatpush.bf16.msra.mxu0 %v130
  %263 = vmatmul.bf16.gmra.mxu0 %v173
  %v264 = vpop.f32.mrf.mxu0
  %v265 = vadd.f32 %v54, %v264
  %v266 = vpop.f32.mrf.mxu0
  %267 = vdwg.mxu0
  %268 = vmatpush.bf16.msra.mxu0 0
  %269 = vmatpush.bf16.msra.mxu0 0
  %270 = vmatpush.bf16.msra.mxu0 0
  %271 = vmatpush.bf16.msra.mxu0 0
  %272 = vmatpush.bf16.msra.mxu0 0
  %273 = vmatpush.bf16.msra.mxu0 %v192
  %274 = vmatpush.bf16.msra.mxu0 %v140
  %275 = vmatpush.bf16.msra.mxu0 %v131
  %276 = vmatmul.bf16.gmra.mxu0 %v173
  %v277 = vpop.f32.mrf.mxu0
  %v278 = vadd.f32 %v54, %v277
  %v279 = vpop.f32.mrf.mxu0
  %280 = vdwg.mxu0
  %281 = vmatpush.bf16.msra.mxu0 0
  %282 = vmatpush.bf16.msra.mxu0 0
  %283 = vmatpush.bf16.msra.mxu0 0
  %284 = vmatpush.bf16.msra.mxu0 0
  %285 = vmatpush.bf16.msra.mxu0 0
  %286 = vmatpush.bf16.msra.mxu0 %v195
  %287 = vmatpush.bf16.msra.mxu0 %v141
  %288 = vmatpush.bf16.msra.mxu0 %v132
  %289 = vmatmul.bf16.gmra.mxu0 %v173
  %v290 = vpop.f32.mrf.mxu0
  %v291 = vadd.f32 %v54, %v290
  %v292 = vpop.f32.mrf.mxu0
  %293 = vdwg.mxu0
  %294 = vmatpush.bf16.msra.mxu0 0
  %295 = vmatpush.bf16.msra.mxu0 0
  %296 = vmatpush.bf16.msra.mxu0 0
  %297 = vmatpush.bf16.msra.mxu0 0
  %298 = vmatpush.bf16.msra.mxu0 0
  %299 = vmatpush.bf16.msra.mxu0 %v198
  %300 = vmatpush.bf16.msra.mxu0 %v142
  %301 = vmatpush.bf16.msra.mxu0 %v133
  %302 = vmatmul.bf16.gmra.mxu0 %v173
  %v303 = vpop.f32.mrf.mxu0
  %v304 = vadd.f32 %v54, %v303
  %v305 = vpop.f32.mrf.mxu0
  %306 = vdwg.mxu0
  %307 = vmatpush.bf16.msra.mxu0 0
  %308 = vmatpush.bf16.msra.mxu0 0
  %309 = vmatpush.bf16.msra.mxu0 0
  %310 = vmatpush.bf16.msra.mxu0 0
  %311 = vmatpush.bf16.msra.mxu0 0
  %312 = vmatpush.bf16.msra.mxu0 %v201
  %313 = vmatpush.bf16.msra.mxu0 %v143
  %314 = vmatpush.bf16.msra.mxu0 %v134
  %315 = vmatmul.bf16.gmra.mxu0 %v173
  %v316 = vpop.f32.mrf.mxu0
  %v317 = vadd.f32 %v54, %v316
  %v318 = vpop.f32.mrf.mxu0
  %319 = vdwg.mxu0
  %v320 = vld [vmem:[%s1] sm:$0xff]
  %v321 = vld [vmem:[%s1 + $0x8] sm:$0x1]
  %v324 = vperm.slane %v320, 0
  %v325 = vperm.slane %v320, 1
  %v326 = vperm.slane %v320, 2
  %v327 = vperm.slane %v320, 3
  %v328 = vperm.slane %v320, 4
  %v329 = vperm.slane %v320, 5
  %v330 = vperm.slane %v320, 6
  %v331 = vperm.slane %v320, 7
  %v332 = vperm.slane %v321, 0
  %v342 = vmul.f32 %v213, %v324
  %v343 = vmul.f32 %v226, %v325
  %v344 = vmul.f32 %v239, %v326
  %v345 = vmul.f32 %v252, %v327
  %v346 = vmul.f32 %v265, %v328
  %v347 = vmul.f32 %v278, %v329
  %v348 = vmul.f32 %v291, %v330
  %v349 = vmul.f32 %v304, %v331
  %v350 = vmul.f32 %v317, %v332
  %v351 = vpack.c.bf16 %v343, %v342
  %v352 = vpack.c.bf16 %v345, %v344
  %v353 = vpack.c.bf16 %v347, %v346
  %v354 = vpack.c.bf16 %v349, %v348
  %v355 = vpack.c.bf16 %v350, %v350
  %v356 = vld [vmem:[%s4] sm:$0xf]
  %v357 = vld [vmem:[%s4 + $0x4] sm:$0xf]
  %v358 = vld [vmem:[%s5] sm:$0xff]
  %v359 = vld [vmem:[%s5 + $0x8] sm:$0xff]
  %361 = vset.pattern.permute.xlu0 0
  %362 = vperm.xlu0 %361, %v358
  %v363 = vpop.permute.xlu0 %362
  %366 = vset.pattern.permute.xlu0 0
  %367 = vperm.xlu0 %366, %v359
  %v368 = vpop.permute.xlu0 %367
  %v372 = vunpack.c.l.b16 %v356
  %v373 = vunpack.c.l.b16 %v357
  %v374 = vpack.c.b16 %v373, %v372
  %vm375 = vcmask 588800
  %v377 = vsel %vm375, %v374, 0
  %vm379 = vcmask 1043456
  %v381 = vsel %vm379, %v355, 0
  %383 = vmatpush.bf16.msra.mxu0 0
  %384 = vmatpush.bf16.msra.mxu0 0
  %385 = vmatpush.bf16.msra.mxu0 0
  %386 = vmatpush.bf16.msra.mxu0 %v381
  %387 = vmatpush.bf16.msra.mxu0 %v354
  %388 = vmatpush.bf16.msra.mxu0 %v353
  %389 = vmatpush.bf16.msra.mxu0 %v352
  %390 = vmatpush.bf16.msra.mxu0 %v351
  %391 = vmatmul.bf16.gmra.mxu0 %v377
  %v392 = vpop.f32.mrf.mxu0
  %v393 = vadd.f32 %v363, %v392
  %v394 = vpop.f32.mrf.mxu0
  %v395 = vadd.f32 %v368, %v394
  %396 = vdwg.mxu0
  %397 = vst [vmem:[%s6] sm:$0xff] %v393
  %398 = vst [vmem:[%s6 + $0x8] sm:$0xff] %v395
  // Predicated region
  $region26: #{_fused_forward_impl.1} parent=0 // pred_check
    _
  $region27: #{_fused_forward_impl.1} parent=0 // pred_check_branch
    %400 = sbr.rel (0) target = $region29
  $region28: #{_fused_forward_impl.1} parent=0 // pred_region
    _
  $region29: #{_fused_forward_impl.1} parent=0 // pred_fallthru
    _
  // Predicated region
  $region30: #{_fused_forward_impl.1} parent=0 // pred_check
    _
  $region31: #{_fused_forward_impl.1} parent=0 // pred_check_branch
    %402 = sbr.rel (0) target = $region33
  $region32: #{_fused_forward_impl.1} parent=0 // pred_region
    _
  $region33: #{_fused_forward_impl.1} parent=0 // pred_fallthru
    _

</llo_original>
